<compile_context>
chip_gen: v5e
topology: v5e:2x2
jax: 0.10.0
libtpu: 0.0.40
codegen_flags: <defaults>
</compile_context>

<pallas_src>
import functools

import jax
import jax.numpy as jnp
from jax.experimental import pallas as pl
from jax.experimental.pallas import tpu as pltpu

LANE = 128            # TPU lane width
MAX_TC = 64           # channel rows per block (keeps vreg pressure low; multiple of 8)
MAX_TF = 32768        # cap on reduction-tile width (multiple of LANE)
SPLIT_MIN_TILES = 4   # min reduction tiles before splitting them over a 2nd parallel axis


def _cdiv(a, b):
    return -(-a // b)


def _vmem_limit_bytes():
    """Generation-aware scoped-VMEM request."""
    try:
        cap = int(pltpu.get_tpu_info().vmem_capacity_bytes)
    except Exception:
        cap = None
    if cap is None or cap <= (80 << 20):
        return 40 << 20                       # v7x-class (64 MiB / TC) or unknown
    return min(int(cap * 0.65), 96 << 20)     # v5e / v6e class (128 MiB)


def _moment_kernel(nf_total, nf_per_split, rem, rows_blk, unroll, emit_cast,
                   has_oob, x_ref, *refs):
    """Streams one (TC, TF) tile along the reduction axis.

    Scratch: shift_acc (TC,1), s_acc/q_acc (TC,128) lane partials.  Per step the
    work is per-(rows_blk, 128) slices loaded straight from x_ref (fused cast +
    shift-subtract); only the slice containing the ragged boundary of the global
    last tile is masked; clamped duplicate tiles contribute nothing."""
    if emit_cast:
        stats_ref, cast_ref, shift_acc, s_acc, q_acc = refs
    else:
        stats_ref, shift_acc, s_acc, q_acc = refs
        cast_ref = None

    sp = pl.program_id(1)
    fj = pl.program_id(2)
    gt = sp * nf_per_split + fj                  # global reduction-tile index
    tc, tf = x_ref.shape
    n_lane = tf // LANE

    @pl.when(fj == 0)
    def _init():
        # First column of this split's range (always a valid column).
        shift_acc[...] = x_ref[:, 0:1].astype(jnp.float32)
        s_acc[...] = jnp.zeros_like(s_acc)
        q_acc[...] = jnp.zeros_like(q_acc)

    def accumulate(n_full, tail):
        # n_full fully-valid 128-lane slices, plus `tail` valid lanes in the next one.
        for r0 in range(0, tc, rows_blk):
            nr = min(rows_blk, tc - r0)
            sh = jnp.broadcast_to(shift_acc[r0:r0 + nr, :], (nr, LANE))
            zero = jnp.zeros((nr, LANE), jnp.float32)

            def lane_step(k, carry):
                s_b, q_b = carry
                c0 = pl.multiple_of(k * LANE, LANE)
                xf = x_ref[pl.ds(r0, nr), pl.ds(c0, LANE)].astype(jnp.float32)
                if emit_cast:
                    cast_ref[pl.ds(r0, nr), pl.ds(c0, LANE)] = xf
                xk = xf - sh
                return s_b + xk, q_b + xk * xk

            if n_full > 0:
                s_blk, q_blk = jax.lax.fori_loop(
                    0, n_full, lane_step, (zero, zero),
                    unroll=min(unroll, n_full))
            else:
                s_blk, q_blk = zero, zero

            if tail > 0:
                c0 = n_full * LANE
                xf = x_ref[pl.ds(r0, nr), pl.ds(c0, LANE)].astype(jnp.float32)
                if emit_cast:
                    cast_ref[pl.ds(r0, nr), pl.ds(c0, LANE)] = xf
                lane = jax.lax.broadcasted_iota(jnp.int32, (nr, LANE), 1)
                xk = jnp.where(lane < tail, xf - sh, 0.0)
                s_blk = s_blk + xk
                q_blk = q_blk + xk * xk

            s_acc[r0:r0 + nr, :] = s_acc[r0:r0 + nr, :] + s_blk
            q_acc[r0:r0 + nr, :] = q_acc[r0:r0 + nr, :] + q_blk

    last = nf_total - 1
    if rem == tf:                                 # no ragged boundary anywhere
        if has_oob:
            @pl.when(gt <= last)
            def _():
                accumulate(n_lane, 0)
        else:
            accumulate(n_lane, 0)
    else:
        if nf_total > 1:
            @pl.when(gt < last)
            def _():
                accumulate(n_lane, 0)

        @pl.when(gt == last)
        def _():
            accumulate(rem // LANE, rem % LANE)
        # gt > last (clamped duplicate tile): contributes nothing.

    @pl.when(fj == pl.num_programs(2) - 1)
    def _finalize():
        s_tot = jnp.sum(s_acc[...], axis=1, keepdims=True)
        q_tot = jnp.sum(q_acc[...], axis=1, keepdims=True)
        lane = jax.lax.broadcasted_iota(jnp.int32, (tc, LANE), 1)
        packed = jnp.where(lane == 0, shift_acc[...],
                           jnp.where(lane == 1, s_tot,
                                     jnp.where(lane == 2, q_tot, 0.0)))
        stats_ref[0, :, :] = packed


def _row_moments(y, emit_cast, allow_split=True):
    """y: (C, F) in its original dtype.  Streams y once and returns per-(split, row)
    shifted partial moments:
      shift, s, q : (ns, C) float32
      m_split     : (ns,)  float32   -- valid column count per split
      y_f32       : (C, F) float32 cast of y if emit_cast else None
    """
    C, f_true = y.shape
    F = f_true
    if F < LANE:                                   # tiny tensors: pad to one lane tile
        y = jnp.pad(y, ((0, 0), (0, LANE - F)))
        F = LANE

    bpe = jnp.dtype(y.dtype).itemsize
    rows_blk = {1: 32, 2: 16}.get(bpe, 8)          # rows per packed sublane block

    TC = C if C <= MAX_TC else MAX_TC
    nc = _cdiv(C, TC)

    vmem_limit = _vmem_limit_bytes()
    # Double-buffered input (+ double-buffered fused f32 output) per column of a tile.
    per_col = TC * (2 * bpe + (2 * 4 if emit_cast else 0))
    budget = vmem_limit - (6 << 20)                # headroom: scratch, stats out, compiler tmp
    TF = min(MAX_TF, (F // LANE) * LANE,
             max(LANE, (budget // per_col) // LANE * LANE))

    nf_total = _cdiv(F, TF)
    rem = f_true - (nf_total - 1) * TF             # valid cols in the global last tile
    ns = 2 if (allow_split and nc == 1 and nf_total >= SPLIT_MIN_TILES) else 1
    nf_per_split = _cdiv(nf_total, ns)
    has_oob = ns * nf_per_split > nf_total
    unroll = max(1, min(8, TF // LANE))

    def tile_index(ci, sp, fj):
        t = sp * nf_per_split + fj
        if has_oob:
            t = jnp.minimum(t, nf_total - 1)       # duplicate tile; kernel skips it
        return (ci, t)

    out_shape = [jax.ShapeDtypeStruct((ns, C, LANE), jnp.float32)]
    out_specs = [pl.BlockSpec((1, TC, LANE), lambda ci, sp, fj: (sp, ci, 0))]
    if emit_cast:
        out_shape.append(jax.ShapeDtypeStruct((C, F), jnp.float32))
        out_specs.append(pl.BlockSpec((TC, TF), tile_index))

    kernel = functools.partial(_moment_kernel, nf_total, nf_per_split, rem,
                               rows_blk, unroll, emit_cast, has_oob)

    outs = pl.pallas_call(
        kernel,
        out_shape=tuple(out_shape),
        grid_spec=pltpu.PrefetchScalarGridSpec(
            num_scalar_prefetch=0,
            grid=(nc, ns, nf_per_split),
            in_specs=[pl.BlockSpec((TC, TF), tile_index)],
            out_specs=out_specs,
            scratch_shapes=[pltpu.VMEM((TC, 1), jnp.float32),
                            pltpu.VMEM((TC, LANE), jnp.float32),
                            pltpu.VMEM((TC, LANE), jnp.float32)],
        ),
        compiler_params=pltpu.CompilerParams(
            dimension_semantics=("parallel", "parallel", "arbitrary"),
            vmem_limit_bytes=int(vmem_limit)),
    )(y)

    stats = outs[0]
    shift, s, q = stats[..., 0], stats[..., 1], stats[..., 2]
    y_f32 = None
    if emit_cast:
        y_f32 = outs[1]
        if F != f_true:
            y_f32 = y_f32[:, :f_true]
    m_split = jnp.asarray(
        [min(f_true, (sp + 1) * nf_per_split * TF) - sp * nf_per_split * TF
         for sp in range(ns)], dtype=jnp.float32)
    return shift, s, q, m_split, y_f32


def _combine_groups(shift, s, q, m, n):
    """Chan-style recombination of shifted group partials along axis 0.
    Group g holds m[g] elements with reference point shift[g], shifted sum s[g] and
    shifted sum of squares q[g].  Returns (mean, unbiased std)."""
    n = jnp.asarray(n, dtype=jnp.float32)
    mean = jnp.sum(m * shift + s, axis=0) / n
    d = shift - mean
    ss = jnp.sum(q + 2.0 * d * s + m * d * d, axis=0)
    var = jnp.maximum(ss / (n - 1.0), 0.0)          # n == 1 -> inf/NaN, same as torch.std
    return mean, jnp.sqrt(var)


def _choose_rows(n):
    """Row count for the per-tensor case: free reshape (n % r == 0), filled sublanes."""
    for r in (1024, 512, 256, 128, 64, 32, 16, 8):
        if n % r == 0 and n // r >= LANE:
            return r
    for r in (8, 4, 2):
        if n % r == 0:
            return r
    return None


def lsq_plus_observer_forward(x, bit=8, symmetric=True, ch_axis=-1):
    """JAX/Pallas equivalent of LSQPlusObserver.forward.

    Returns (x_float32, mean, std, min_val, max_val): x_float32 is what the PyTorch
    forward returns; the other values mirror the buffers it updates.
    """
    assert symmetric is True, "LSQPlusObserver requires symmetric=True"
    x = jnp.asarray(x)
    if x.size == 0:
        return x, None, None, None, None
    emit_cast = x.dtype != jnp.float32   # f32 inputs: returning x itself is the "copy"

    if ch_axis == -1:
        n_total = x.size
        r = _choose_rows(n_total)
        if r is not None:
            y = x.reshape(r, n_total // r)                  # free (contiguous) reshape
            shift, s, q, m_split, y_f32 = _row_moments(y, emit_cast)
            m = jnp.broadcast_to(m_split[:, None], shift.shape)
            mean, std = _combine_groups(shift.reshape(-1), s.reshape(-1),
                                        q.reshape(-1), m.reshape(-1), n_total)
            x_ret = y_f32.reshape(x.shape) if emit_cast else x
        else:
            # No usable divisor (odd/prime size): zero-pad the flat view to 8 full
            # sublane rows and remove the padding's contribution analytically.
            cols = _cdiv(n_total, 8)
            flat = jnp.pad(x.reshape(-1), (0, 8 * cols - n_total))
            shift, s, q, _, _ = _row_moments(flat.reshape(8, cols),
                                             emit_cast=False, allow_split=False)
            shift, s, q = shift[0], s[0], q[0]
            m_rows = jnp.clip(jnp.float32(n_total)
                              - jnp.arange(8, dtype=jnp.float32) * cols,
                              0.0, float(cols))
            pad_rows = jnp.float32(cols) - m_rows
            s = s + pad_rows * shift                        # padded zeros added (0 - shift)
            q = q - pad_rows * shift * shift                # and (0 - shift)^2
            mean, std = _combine_groups(shift, s, q, m_rows, n_total)
            x_ret = x.astype(jnp.float32) if emit_cast else x
    else:
        axis = ch_axis % x.ndim
        if axis == 0:
            y = x.reshape(x.shape[0], -1)                   # free (contiguous) reshape
            shift, s, q, m_split, y_f32 = _row_moments(y, emit_cast)
            x_ret = y_f32.reshape(x.shape) if emit_cast else x
        else:
            # TODO(synk): fold this transpose into the kernel grid (multi-axis
            # index_map over pre/channel/post dims) to avoid the full HBM copy that
            # jnp.moveaxis materializes for inner channel axes.
            y = jnp.moveaxis(x, axis, 0).reshape(x.shape[axis], -1)
            shift, s, q, m_split, _ = _row_moments(y, emit_cast=False)
            x_ret = x.astype(jnp.float32) if emit_cast else x
        mean, std = _combine_groups(shift, s, q, m_split[:, None],
                                    float(y.shape[1]))

    min_val = mean - 3.0 * std
    max_val = mean + 3.0 * std
    return x_ret, mean, std, min_val, max_val


if __name__ == "__main__":
    key = jax.random.PRNGKey(0)
    ks = jax.random.split(key, 4)

    def ref_stats(arr, ch_axis):
        arr = arr.astype(jnp.float32)
        if ch_axis == -1:
            return jnp.mean(arr), jnp.std(arr, ddof=1)
        yy = jnp.moveaxis(arr, ch_axis, 0).reshape(arr.shape[ch_axis], -1)
        return jnp.mean(yy, axis=1), jnp.std(yy, axis=1, ddof=1)

    def close(a, b):
        return bool(jnp.allclose(a, b, rtol=1e-4, atol=1e-5))

    def check(arr, ch_axis):
        x_out, mean, std, mn, mx = lsq_plus_observer_forward(
            arr, bit=8, symmetric=True, ch_axis=ch_axis)
        jax.block_until_ready((x_out, mean, std, mn, mx))
        m_ref, s_ref = ref_stats(arr, ch_axis)
        good = close(x_out, arr.astype(jnp.float32))
        good = good and close(mean, m_ref) and close(std, s_ref)
        good = good and close(mn, m_ref - 3 * s_ref)
        good = good and close(mx, m_ref + 3 * s_ref)
        return good

    ok = True
    # Conv weight (OIHW): per-channel F = 512 (lane aligned).
    w1 = jax.random.normal(ks[0], (4, 8, 8, 8), dtype=jnp.float32) * 0.5 + 0.1
    # Unaligned conv weight: per-channel F = 200 (masked boundary slice).
    w2 = jax.random.normal(ks[1], (4, 8, 5, 5), dtype=jnp.float32) * 0.3 - 0.05
    for arr in (w1, w2):
        for ch_axis in (0, -1):
            ok = ok and check(arr, ch_axis)

    # bf16 input: kernel streams native bf16 and emits the fused float32 copy.
    ok = ok and check(w1.astype(jnp.bfloat16), 0)
    ok = ok and check(w1.astype(jnp.bfloat16), -1)

    # Odd element count: per-tensor padded-8-row fallback; tiny per-channel F (< 128).
    w3 = jax.random.normal(ks[2], (3, 7, 11), dtype=jnp.float32)
    ok = ok and check(w3, -1)
    ok = ok and check(w3, 0)

    # Shrink tiles so the split (2nd "parallel" axis) + clamped-tile + ragged-tail
    # paths are exercised at small sizes (rebinding module globals; main is module scope).
    MAX_TF = 256
    SPLIT_MIN_TILES = 2
    w4 = jax.random.normal(ks[3], (4, 2120), dtype=jnp.float32) * 0.2 + 0.3
    ok = ok and check(w4, 0)    # ns=2, 9 tiles, one clamped duplicate tile, ragged tail
    ok = ok and check(w4, -1)   # per-tensor combine across (split, row) groups

    if ok:
        print("KERNEL_OK")
    else:
        raise SystemExit("mismatch vs reference")
</pallas_src>

<mosaic_0001>
module attributes {stable_mosaic.version = 11 : i64} {
  func.func @_moment_kernel(%arg0: i32, %arg1: i32, %arg2: i32, %arg3: memref<4x512xf32, #tpu.memory_space<vmem>>, %arg4: memref<1x4x128xf32, #tpu.memory_space<vmem>>, %arg5: memref<4x1xf32, #tpu.memory_space<vmem>>, %arg6: memref<4x128xf32, #tpu.memory_space<vmem>>, %arg7: memref<4x128xf32, #tpu.memory_space<vmem>>) attributes {dimension_semantics = [#tpu.dimension_semantics<parallel>, #tpu.dimension_semantics<parallel>, #tpu.dimension_semantics<arbitrary>], iteration_bounds = array<i64: 1, 1, 1>, scalar_prefetch = 0 : i64, scratch_operands = 3 : i64, tpu.core_type = #tpu.core_type<tc>, window_params = [{transform_indices = @transform_0, window_bounds = array<i64: 4, 512>}, {transform_indices = @transform_1, window_bounds = array<i64: 1, 4, 128>}]} {
    %c0_i32 = arith.constant 0 : i32
    %0 = arith.cmpi eq, %arg2, %c0_i32 : i32
    %1 = arith.extui %0 : i1 to i32
    %c0_i32_0 = arith.constant 0 : i32
    %2 = arith.cmpi ne, %1, %c0_i32_0 : i32
    scf.if %2 {
      %c0_20 = arith.constant 0 : index
      %c0_21 = arith.constant 0 : index
      %48 = vector.load %arg3[%c0_20, %c0_21] : memref<4x512xf32, #tpu.memory_space<vmem>>, vector<4x1xf32>
      %c0_22 = arith.constant 0 : index
      %c0_23 = arith.constant 0 : index
      %49 = vector.load %arg5[%c0_22, %c0_23] : memref<4x1xf32, #tpu.memory_space<vmem>>, vector<4x1xf32>
      tpu.vector_store %arg5[%c0_22, %c0_23], %48 {strides = array<i32>} : memref<4x1xf32, #tpu.memory_space<vmem>>, vector<4x1xf32>,
      %cst_24 = arith.constant 0.000000e+00 : f32
      %50 = vector.broadcast %cst_24 : f32 to vector<4x128xf32>
      %c0_25 = arith.constant 0 : index
      %c0_26 = arith.constant 0 : index
      %51 = vector.load %arg6[%c0_25, %c0_26] : memref<4x128xf32, #tpu.memory_space<vmem>>, vector<4x128xf32>
      tpu.vector_store %arg6[%c0_25, %c0_26], %50 {strides = array<i32>} : memref<4x128xf32, #tpu.memory_space<vmem>>, vector<4x128xf32>,
      %cst_27 = arith.constant 0.000000e+00 : f32
      %52 = vector.broadcast %cst_27 : f32 to vector<4x128xf32>
      %c0_28 = arith.constant 0 : index
      %c0_29 = arith.constant 0 : index
      %53 = vector.load %arg7[%c0_28, %c0_29] : memref<4x128xf32, #tpu.memory_space<vmem>>, vector<4x128xf32>
      tpu.vector_store %arg7[%c0_28, %c0_29], %52 {strides = array<i32>} : memref<4x128xf32, #tpu.memory_space<vmem>>, vector<4x128xf32>,
    } else {
    }
    %c0 = arith.constant 0 : index
    %c0_1 = arith.constant 0 : index
    %3 = vector.load %arg5[%c0, %c0_1] : memref<4x1xf32, #tpu.memory_space<vmem>>, vector<4x1xf32>
    %4 = vector.shape_cast %3 : vector<4x1xf32> to vector<4x1xf32>
    %5 = vector.broadcast %4 : vector<4x1xf32> to vector<4x128xf32>
    %cst = arith.constant 0.000000e+00 : f32
    %6 = vector.broadcast %cst : f32 to vector<4x128xf32>
    %c0_i32_2 = arith.constant 0 : i32
    %c128_i32 = arith.constant 128 : i32
    %7 = arith.muli %c0_i32_2, %c128_i32 : i32
    %8 = tpu.assume_multiple %7, 128 : i32
    %c0_3 = arith.constant 0 : index
    %9 = arith.index_cast %8 : i32 to index
    %10 = vector.load %arg3[%c0_3, %9] : memref<4x512xf32, #tpu.memory_space<vmem>>, vector<4x128xf32>
    %11 = arith.subf %10, %5 : vector<4x128xf32>
    %12 = arith.addf %6, %11 : vector<4x128xf32>
    %13 = arith.mulf %11, %11 : vector<4x128xf32>
    %14 = arith.addf %6, %13 : vector<4x128xf32>
    %c1_i32 = arith.constant 1 : i32
    %c128_i32_4 = arith.constant 128 : i32
    %15 = arith.muli %c1_i32, %c128_i32_4 : i32
    %16 = tpu.assume_multiple %15, 128 : i32
    %c0_5 = arith.constant 0 : index
    %17 = arith.index_cast %16 : i32 to index
    %18 = vector.load %arg3[%c0_5, %17] : memref<4x512xf32, #tpu.memory_space<vmem>>, vector<4x128xf32>
    %19 = arith.subf %18, %5 : vector<4x128xf32>
    %20 = arith.addf %12, %19 : vector<4x128xf32>
    %21 = arith.mulf %19, %19 : vector<4x128xf32>
    %22 = arith.addf %14, %21 : vector<4x128xf32>
    %c2_i32 = arith.constant 2 : i32
    %c128_i32_6 = arith.constant 128 : i32
    %23 = arith.muli %c2_i32, %c128_i32_6 : i32
    %24 = tpu.assume_multiple %23, 128 : i32
    %c0_7 = arith.constant 0 : index
    %25 = arith.index_cast %24 : i32 to index
    %26 = vector.load %arg3[%c0_7, %25] : memref<4x512xf32, #tpu.memory_space<vmem>>, vector<4x128xf32>
    %27 = arith.subf %26, %5 : vector<4x128xf32>
    %28 = arith.addf %20, %27 : vector<4x128xf32>
    %29 = arith.mulf %27, %27 : vector<4x128xf32>
    %30 = arith.addf %22, %29 : vector<4x128xf32>
    %c3_i32 = arith.constant 3 : i32
    %c128_i32_8 = arith.constant 128 : i32
    %31 = arith.muli %c3_i32, %c128_i32_8 : i32
    %32 = tpu.assume_multiple %31, 128 : i32
    %c0_9 = arith.constant 0 : index
    %33 = arith.index_cast %32 : i32 to index
    %34 = vector.load %arg3[%c0_9, %33] : memref<4x512xf32, #tpu.memory_space<vmem>>, vector<4x128xf32>
    %35 = arith.subf %34, %5 : vector<4x128xf32>
    %36 = arith.addf %28, %35 : vector<4x128xf32>
    %37 = arith.mulf %35, %35 : vector<4x128xf32>
    %38 = arith.addf %30, %37 : vector<4x128xf32>
    %c4_i32 = arith.constant 4 : i32
    %c0_10 = arith.constant 0 : index
    %c0_11 = arith.constant 0 : index
    %39 = vector.load %arg6[%c0_10, %c0_11] : memref<4x128xf32, #tpu.memory_space<vmem>>, vector<4x128xf32>
    %40 = arith.addf %39, %36 : vector<4x128xf32>
    %c0_12 = arith.constant 0 : index
    %c0_13 = arith.constant 0 : index
    %41 = vector.load %arg6[%c0_12, %c0_13] : memref<4x128xf32, #tpu.memory_space<vmem>>, vector<4x128xf32>
    tpu.vector_store %arg6[%c0_12, %c0_13], %40 {strides = array<i32>} : memref<4x128xf32, #tpu.memory_space<vmem>>, vector<4x128xf32>,
    %c0_14 = arith.constant 0 : index
    %c0_15 = arith.constant 0 : index
    %42 = vector.load %arg7[%c0_14, %c0_15] : memref<4x128xf32, #tpu.memory_space<vmem>>, vector<4x128xf32>
    %43 = arith.addf %42, %38 : vector<4x128xf32>
    %c0_16 = arith.constant 0 : index
    %c0_17 = arith.constant 0 : index
    %44 = vector.load %arg7[%c0_16, %c0_17] : memref<4x128xf32, #tpu.memory_space<vmem>>, vector<4x128xf32>
    tpu.vector_store %arg7[%c0_16, %c0_17], %43 {strides = array<i32>} : memref<4x128xf32, #tpu.memory_space<vmem>>, vector<4x128xf32>,
    %c0_i32_18 = arith.constant 0 : i32
    %45 = arith.cmpi eq, %arg2, %c0_i32_18 : i32
    %46 = arith.extui %45 : i1 to i32
    %c0_i32_19 = arith.constant 0 : i32
    %47 = arith.cmpi ne, %46, %c0_i32_19 : i32
    scf.if %47 {
      %c0_20 = arith.constant 0 : index
      %c0_21 = arith.constant 0 : index
      %48 = vector.load %arg6[%c0_20, %c0_21] : memref<4x128xf32, #tpu.memory_space<vmem>>, vector<4x128xf32>
      %cst_22 = arith.constant dense<0.000000e+00> : vector<4xf32>
      %49 = vector.multi_reduction <add>, %48, %cst_22 [1] : vector<4x128xf32> to vector<4xf32>
      %50 = vector.shape_cast %49 : vector<4xf32> to vector<4x1xf32>
      %c0_23 = arith.constant 0 : index
      %c0_24 = arith.constant 0 : index
      %51 = vector.load %arg7[%c0_23, %c0_24] : memref<4x128xf32, #tpu.memory_space<vmem>>, vector<4x128xf32>
      %cst_25 = arith.constant dense<0.000000e+00> : vector<4xf32>
      %52 = vector.multi_reduction <add>, %51, %cst_25 [1] : vector<4x128xf32> to vector<4xf32>
      %53 = vector.shape_cast %52 : vector<4xf32> to vector<4x1xf32>
      %54 = tpu.iota {dimensions = array<i32: 1>} : vector<4x128xi32>
      %c0_i32_26 = arith.constant 0 : i32
      %55 = vector.broadcast %c0_i32_26 : i32 to vector<4x128xi32>
      %56 = arith.cmpi eq, %54, %55 : vector<4x128xi32>
      %c0_27 = arith.constant 0 : index
      %c0_28 = arith.constant 0 : index
      %57 = vector.load %arg5[%c0_27, %c0_28] : memref<4x1xf32, #tpu.memory_space<vmem>>, vector<4x1xf32>
      %c1_i32_29 = arith.constant 1 : i32
      %58 = vector.broadcast %c1_i32_29 : i32 to vector<4x128xi32>
      %59 = arith.cmpi eq, %54, %58 : vector<4x128xi32>
      %c2_i32_30 = arith.constant 2 : i32
      %60 = vector.broadcast %c2_i32_30 : i32 to vector<4x128xi32>
      %61 = arith.cmpi eq, %54, %60 : vector<4x128xi32>
      %cst_31 = arith.constant 0.000000e+00 : f32
      %62 = vector.shape_cast %53 : vector<4x1xf32> to vector<4x1xf32>
      %63 = vector.broadcast %62 : vector<4x1xf32> to vector<4x128xf32>
      %64 = vector.broadcast %cst_31 : f32 to vector<4x128xf32>
      %65 = arith.select %61, %63, %64 : vector<4x128xi1>, vector<4x128xf32>
      %66 = vector.shape_cast %50 : vector<4x1xf32> to vector<4x1xf32>
      %67 = vector.broadcast %66 : vector<4x1xf32> to vector<4x128xf32>
      %68 = arith.select %59, %67, %65 : vector<4x128xi1>, vector<4x128xf32>
      %69 = vector.shape_cast %57 : vector<4x1xf32> to vector<4x1xf32>
      %70 = vector.broadcast %69 : vector<4x1xf32> to vector<4x128xf32>
      %71 = arith.select %56, %70, %68 : vector<4x128xi1>, vector<4x128xf32>
      %c0_32 = arith.constant 0 : index
      %c0_33 = arith.constant 0 : index
      %c0_34 = arith.constant 0 : index
      %72 = vector.load %arg4[%c0_32, %c0_33, %c0_34] : memref<1x4x128xf32, #tpu.memory_space<vmem>>, vector<1x4x128xf32>
      %73 = vector.shape_cast %72 : vector<1x4x128xf32> to vector<4x128xf32>
      %74 = vector.shape_cast %71 : vector<4x128xf32> to vector<1x4x128xf32>
      tpu.vector_store %arg4[%c0_32, %c0_33, %c0_34], %74 {strides = array<i32>} : memref<1x4x128xf32, #tpu.memory_space<vmem>>, vector<1x4x128xf32>,
    } else {
    }
    return
  }
  func.func @transform_0(%arg0: i32, %arg1: i32, %arg2: i32) -> (i32, i32) {
    %c1_i32 = arith.constant 1 : i32
    %0 = arith.muli %arg1, %c1_i32 : i32
    %1 = arith.addi %0, %arg2 : i32
    %c0_i32 = arith.constant 0 : i32
    return %arg0, %1 : i32, i32
  }
  func.func @transform_1(%arg0: i32, %arg1: i32, %arg2: i32) -> (i32, i32, i32) {
    %c0_i32 = arith.constant 0 : i32
    %c0_i32_0 = arith.constant 0 : i32
    return %arg1, %arg0, %c0_i32 : i32, i32, i32
  }
}

</mosaic_0001>

<llo_original>
// kernel: tpu_custom_call.1
$region0: #{tpu_custom_call.1}
  #allocation0 [shape = 'u32[]', space=smem, size = 0x4, offset = 0x4, fixed_abs, tag = 'smem constant byte address 0x4 - core index']
  #allocation1 [shape = 'u32[72,128]{1,0:T(1,128)}', space=vmem, size = 0x9000, scoped, tag = 'internal scratch']
  #allocation2 [shape = 'f32[4,1]{1,0:T(4,128)}', space=vmem, size = 0x800, scoped, tag = 'scratch operand']
  #allocation3 [shape = 'f32[4,128]{1,0:T(4,128)}', space=vmem, size = 0x800, scoped, tag = 'scratch operand']
  #allocation4 [shape = 'f32[4,128]{1,0:T(4,128)}', space=vmem, size = 0x800, scoped, tag = 'scratch operand']
  %s0 = inlined_call_operand.hbm [shape: f32[4,512], index: 0, kind: input, shape index: {}]
  %s1 = inlined_call_operand.hbm [shape: f32[1,4,128], index: 1, kind: output, shape index: {}]
  %s2 = sld [smem:[#allocation0]]
  $region26: #{tpu_custom_call.1} parent=0
    _
  %s4 = ssub.s32 1, %s2
  %s5 = scalar_select 0, %s4, %s2
  $region1: #{tpu_custom_call.1} parent=0
    #allocation5 [shape = 'u8[8192]{0}', space=vmem, size = 0x2000, scoped, tag = 'input window, operand 0, single buffered']
    #allocation6 [shape = 's32[1]{0}', space=sflag, size = 0x4, scoped, tag = 'scoped memory for tpu_custom_call.1']
    #allocation7 [shape = 's32[1]{0}', space=sflag, size = 0x4, scoped, tag = 'scoped memory for tpu_custom_call.1']
    #allocation8 [shape = 'u8[2048]{0}', space=vmem, size = 0x800, scoped, tag = 'output window, operand 0, single buffered']
    %6 = vsyncpa [#allocation6], 0
    %7 = vsyncpa [#allocation7], 0
    // Predicated region
    $region2: #{tpu_custom_call.1} parent=1 // pred_check
      _
    $region3: #{tpu_custom_call.1} parent=1 // pred_check_branch
      %9 = sbr.rel (0) target = $region5
    $region4: #{tpu_custom_call.1} parent=1 // pred_region
      %s10 = sadd.s32 0, 0
      %s11 = smul.u32 4, %s10
      %13 = vsyncadd [#allocation6], 0
      %s14 = smul.addr %s11, 4
      %s15 = scalar_lea.hbm %s0, %s14
      %s17 = sshll.u32 %s15, 4
      %s18 = int_to_ptr.hbm [resolvable:$true] %s17
      %s19 = sshll.u32 [#allocation5], 4
      %s20 = int_to_ptr.vmem [resolvable:$true] %s19
      %22 = dma.hbm_to_vmem [thread:$0]  %s18, 256, %s20, [#allocation6]
    $region5: #{tpu_custom_call.1} parent=1 // pred_fallthru
      _
    // Predicated region
    $region6: #{tpu_custom_call.1} parent=1 // pred_check
      _
    $region7: #{tpu_custom_call.1} parent=1 // pred_check_branch
      %24 = sbr.rel (0) target = $region9
    $region8: #{tpu_custom_call.1} parent=1 // pred_region
      %26 = dma.done [#allocation6], 256
    $region9: #{tpu_custom_call.1} parent=1 // pred_fallthru
      _
    %s27 = sadd.s32 0, 0
    %s28 = smul.u32 4, %s27
    %p29 = scmp.eq.s32.totalorder 0, 0
    // Predicated region
    $region10: #{tpu_custom_call.1} parent=1 // pred_check
      %p30 = pneg %p29
    $region11: #{tpu_custom_call.1} parent=1 // pred_check_branch
      %32 = sbr.rel (%p30) target = $region13
    $region12: #{tpu_custom_call.1} parent=1 // pred_region
      %v33 = vld [vmem:[#allocation5] sm:$0xf]
      %vm34 = vcmask 3072
      %35 = vst.msk [vmem:[#allocation2] sm:$0xf] %vm34, %v33
      %36 = vst [vmem:[#allocation3] sm:$0xf] 0.0
      %37 = vst [vmem:[#allocation4] sm:$0xf] 0.0
    $region13: #{tpu_custom_call.1} parent=1 // pred_fallthru
      _
    %v38 = vld [vmem:[#allocation2] sm:$0xf]
    %40 = vset.pattern.permute.xlu0 0
    %41 = vperm.xlu0 %40, %v38
    %v42 = vpop.permute.xlu0 %41
    %v44 = vld [vmem:[#allocation5] sm:$0xf]
    %v45 = vsub.f32 %v44, %v42
    %v46 = vadd.f32 %v45, 0.0
    %v47 = vmul.f32 %v45, %v45
    %v48 = vadd.f32 %v47, 0.0
    %s49 = scalar_lea.vmem [#allocation5], 4
    %v50 = vld [vmem:[%s49] sm:$0xf]
    %v51 = vsub.f32 %v50, %v42
    %v52 = vadd.f32 %v46, %v51
    %v53 = vmul.f32 %v51, %v51
    %v54 = vadd.f32 %v48, %v53
    %s55 = scalar_lea.vmem [#allocation5], 8
    %v56 = vld [vmem:[%s55] sm:$0xf]
    %v57 = vsub.f32 %v56, %v42
    %v58 = vadd.f32 %v52, %v57
    %v59 = vmul.f32 %v57, %v57
    %v60 = vadd.f32 %v54, %v59
    %s61 = scalar_lea.vmem [#allocation5], 12
    %v62 = vld [vmem:[%s61] sm:$0xf]
    %v63 = vsub.f32 %v62, %v42
    %v64 = vadd.f32 %v58, %v63
    %v65 = vmul.f32 %v63, %v63
    %v66 = vadd.f32 %v60, %v65
    %v67 = vld [vmem:[#allocation3] sm:$0xf]
    %v68 = vadd.f32 %v67, %v64
    %69 = vst [vmem:[#allocation3] sm:$0xf] %v68
    %v70 = vld [vmem:[#allocation4] sm:$0xf]
    %v71 = vadd.f32 %v70, %v66
    %72 = vst [vmem:[#allocation4] sm:$0xf] %v71
    // Predicated region
    $region14: #{tpu_custom_call.1} parent=1 // pred_check
      %p73 = pneg %p29
    $region15: #{tpu_custom_call.1} parent=1 // pred_check_branch
      %75 = sbr.rel (%p73) target = $region17
    $region16: #{tpu_custom_call.1} parent=1 // pred_region
      %v76 = vld [vmem:[#allocation3] sm:$0xf]
      %vm77 = vcmask 1043456
      %v78 = vsel %vm77, %v76, 0.0
      %79 = vadd.xlane.f32.xlu0 %v78
      %v80 = vpop.xlane.xlu0 %79
      %v81 = vld [vmem:[#allocation4] sm:$0xf]
      %v82 = vsel %vm77, %v81, 0.0
      %83 = vadd.xlane.f32.xlu0 %v82
      %v84 = vpop.xlane.xlu0 %83
      %v85 = vlaneseq
      %v86 = vand.u32 %v85, 127
      %vm87 = vcmp.eq.s32.totalorder %v86, 0
      %v88 = vld [vmem:[#allocation2] sm:$0xf]
      %vm89 = vcmp.eq.s32.totalorder %v86, 1
      %vm90 = vcmp.eq.s32.totalorder %v86, 2
      %v91 = vsel %vm90, %v84, 0.0
      %v92 = vsel %vm89, %v80, %v91
      %94 = vset.pattern.permute.xlu0 0
      %95 = vperm.xlu0 %94, %v88
      %v96 = vpop.permute.xlu0 %95
      %v98 = vsel %vm87, %v96, %v92
      %99 = vst [vmem:[#allocation8] sm:$0xf] %v98
    $region17: #{tpu_custom_call.1} parent=1 // pred_fallthru
      _
    // Predicated region
    $region18: #{tpu_custom_call.1} parent=1 // pred_check
      _
    $region19: #{tpu_custom_call.1} parent=1 // pred_check_branch
      %101 = sbr.rel (0) target = $region21
    $region20: #{tpu_custom_call.1} parent=1 // pred_region
      %103 = vsyncadd [#allocation7], 0
      %s105 = sshll.u32 [#allocation8], 4
      %s106 = int_to_ptr.vmem [resolvable:$true] %s105
      %s107 = sshll.u32 %s1, 4
      %s108 = int_to_ptr.hbm [resolvable:$true] %s107
      %110 = dma.vmem_to_hbm [thread:$0]  %s106, 64, %s108, [#allocation7]
    $region21: #{tpu_custom_call.1} parent=1 // pred_fallthru
      _
    // Predicated region
    $region22: #{tpu_custom_call.1} parent=1 // pred_check
      _
    $region23: #{tpu_custom_call.1} parent=1 // pred_check_branch
      %112 = sbr.rel (0) target = $region25
    $region24: #{tpu_custom_call.1} parent=1 // pred_region
      %114 = dma.done [#allocation7], 64
    $region25: #{tpu_custom_call.1} parent=1 // pred_fallthru
      _
    %115 = vsyncpa [#allocation6], 1
    %116 = vsyncpa [#allocation7], 1

</llo_original>
